<compile_context>
chip_gen: v7x
topology: tpu7x:2x2x1
jax: 0.10.0
libtpu: 0.0.40
codegen_flags: <defaults>
</compile_context>

<pallas_src>
import functools

import jax
import jax.numpy as jnp
from jax.experimental import pallas as pl
from jax.experimental.pallas import tpu as pltpu


def _round_up(x, m):
    return ((x + m - 1) // m) * m


# ----------------------------------------------------------------------------
# Fused MLP kernel: per M-tile compute
#   h0 = relu(concat(x_f) @ W0 + b0) ; h_l = relu(h_{l-1} @ W_l + b_l)
# and write the final activation (true width, no lane padding on the output).
# ----------------------------------------------------------------------------
def _fused_mlp_kernel(*refs, num_features, num_layers, mxu_dtype):
    F, L = num_features, num_layers
    feat_refs = refs[:F]
    out_ref = refs[-1]

    # Layer-0 input: lane-concat the feature tiles (the torch.cat), so the
    # whole first layer is a single MXU push instead of F tiny-K pushes.
    if F == 1:
        x = feat_refs[0][...]
    else:
        x = jnp.concatenate([r[...] for r in feat_refs], axis=-1)
    x = x.astype(mxu_dtype)

    idx = F
    h = None
    for l in range(L):
        w = refs[idx][...]
        b = refs[idx + 1][...]
        idx += 2
        acc = jnp.dot(x, w, preferred_element_type=jnp.float32)   # MXU
        acc = acc + b.astype(jnp.float32)                          # VPU, f32
        h = jnp.maximum(acc, 0.0)                                  # ReLU, f32
        if l + 1 < L:
            x = h.astype(mxu_dtype)                                # next MXU op

    out_ref[...] = h.astype(out_ref.dtype)


def fused_mlp(feats, kernel_params, n_out, *, mxu_dtype=jnp.float32,
              max_tile_m=2048, vmem_limit_bytes=48 * 1024 * 1024):
    """feats: list of (M, C_f) f32 arrays (flattened over batch/seq).
    kernel_params: flat pre-padded list [W0, b0, W1, b1, ...] (biases (1, N)).
    Returns (M, n_out) in feats dtype."""
    M = feats[0].shape[0]
    F = len(feats)
    L = len(kernel_params) // 2

    # Row tile: large (fewer grid steps => less per-step overhead on a
    # bandwidth-bound kernel), but once M is big enough keep >= 2 tiles so a
    # v7x megacore can shard the M axis across both TensorCores.
    TM = min(max_tile_m, _round_up(M, 8))
    if M >= 1024:
        TM = min(TM, _round_up(pl.cdiv(M, 2), 8))
    grid = (pl.cdiv(M, TM),)

    inputs = list(feats) + list(kernel_params)
    in_specs = [pl.BlockSpec((TM, f.shape[-1]), lambda i: (i, 0)) for f in feats]
    # Constant index_map -> weights/biases DMA'd once, VMEM-resident.
    in_specs += [pl.BlockSpec(p.shape, lambda i: (0, 0)) for p in kernel_params]

    out_spec = pl.BlockSpec((TM, n_out), lambda i: (i, 0))

    # Advisory cost estimate so XLA schedules surrounding ops sensibly.
    flops = 0
    k_prev = sum(f.shape[-1] for f in feats)
    for l in range(L):
        n_l = kernel_params[2 * l].shape[1]
        flops += 2 * M * k_prev * n_l
        k_prev = n_l
    bytes_acc = sum(int(a.size) * a.dtype.itemsize for a in inputs)
    bytes_acc += int(M) * int(n_out) * jnp.dtype(feats[0].dtype).itemsize
    cost = pl.CostEstimate(flops=int(flops), transcendentals=0,
                           bytes_accessed=int(bytes_acc))

    kernel = functools.partial(_fused_mlp_kernel, num_features=F,
                               num_layers=L, mxu_dtype=mxu_dtype)

    return pl.pallas_call(
        kernel,
        out_shape=jax.ShapeDtypeStruct((M, n_out), feats[0].dtype),
        grid_spec=pltpu.PrefetchScalarGridSpec(
            num_scalar_prefetch=0,
            grid=grid,
            in_specs=in_specs,
            out_specs=out_spec,
        ),
        compiler_params=pltpu.CompilerParams(
            # Independent M-tiles; "parallel" is safe on every generation
            # (CORE_PARALLEL is the v7x-specific cross-core lever).
            dimension_semantics=("parallel",),
            vmem_limit_bytes=vmem_limit_bytes,
        ),
        cost_estimate=cost,
    )(*inputs)


# ----------------------------------------------------------------------------
# FullyConnected module (JAX glue around the fused Pallas hot path)
# ----------------------------------------------------------------------------
class FullyConnected:
    def __init__(self, features, layers=None, dropout=0.0, key=None,
                 mxu_dtype=jnp.float32, max_tile_m=2048,
                 min_rows_for_pallas=1024):
        # features: dict name -> {'shape': (C,)}
        self.input_channels = sum(features[f]["shape"][0] for f in features)
        self.dropout_p = dropout
        # TODO(synk): training-mode dropout (p>0) not implemented; p=0.0 (the
        # module default) is an identity at inference, matching eval() mode.
        self.mxu_dtype = mxu_dtype
        self.max_tile_m = max_tile_m
        self.min_rows_for_pallas = min_rows_for_pallas
        self.params = []          # unpadded f32 (reference / small-M fallback)
        self.kernel_params = []   # pre-padded, pre-cast -- built ONCE here

        if isinstance(layers, list):
            if key is None:
                key = jax.random.PRNGKey(0)
            in_dim = self.input_channels
            for n_dim in layers:
                key, kw, kb = jax.random.split(key, 3)
                # PyTorch nn.Linear default init: U(-1/sqrt(in), 1/sqrt(in))
                bound = 1.0 / float(in_dim) ** 0.5
                w = jax.random.uniform(kw, (in_dim, n_dim), jnp.float32,
                                       -bound, bound)
                b = jax.random.uniform(kb, (n_dim,), jnp.float32,
                                       -bound, bound)
                self.params.append((w, b))
                in_dim = n_dim
            self.out_features = layers[-1]

            # One-time weight prep, hoisted out of the forward pass:
            #  - intermediate layer outputs zero-padded to 128 lanes
            #    (lane-dense stores; padded cols are exactly zero through ReLU)
            #  - final layer left UNPADDED so the kernel writes only the true
            #    output bytes to HBM
            #  - weights cast to the MXU operand dtype once
            L = len(layers)
            k_pad = self.input_channels
            for l, (w, b) in enumerate(self.params):
                last = (l == L - 1)
                n_pad = w.shape[1] if last else _round_up(w.shape[1], 128)
                wp = jnp.pad(w, ((0, k_pad - w.shape[0]),
                                 (0, n_pad - w.shape[1])))
                bp = jnp.pad(b, (0, n_pad - b.shape[0])).reshape(1, n_pad)
                self.kernel_params.append(wp.astype(mxu_dtype))
                self.kernel_params.append(bp.astype(jnp.float32))
                k_pad = n_pad
        else:
            self.out_features = self.input_channels

    def __call__(self, x):
        # Iterate x in insertion order, like the PyTorch forward; the kernel
        # consumes the feature streams in the same order it would concatenate.
        names = list(x)
        if not self.params:
            return jnp.concatenate([x[n] for n in names], axis=-1)  # Identity
        lead = x[names[0]].shape[:-1]
        feats = [x[n].reshape(-1, x[n].shape[-1]) for n in names]
        M = feats[0].shape[0]
        if M < self.min_rows_for_pallas:
            # pallas_call launch + pipeline-priming overhead dominates at tiny
            # M; XLA's fused dot matches or beats the kernel there.
            out = jnp.concatenate(feats, axis=-1)
            for w, b in self.params:
                out = jnp.maximum(out @ w + b, 0.0)
        else:
            out = fused_mlp(feats, self.kernel_params, self.out_features,
                            mxu_dtype=self.mxu_dtype,
                            max_tile_m=self.max_tile_m)
        return out.reshape(*lead, self.out_features)


# ----------------------------------------------------------------------------
# Reference (plain JAX) for correctness check
# ----------------------------------------------------------------------------
def reference_forward(module, x):
    feats = jnp.concatenate([x[name] for name in x], axis=-1)
    if not module.params:
        return feats
    lead = feats.shape[:-1]
    flat = feats.reshape(-1, feats.shape[-1])
    for (w, b) in module.params:
        flat = jnp.maximum(flat @ w + b, 0.0)
    return flat.reshape(*lead, module.out_features)


if __name__ == "__main__":
    root = jax.random.PRNGKey(0)
    kx1, kx2, kx3, kx4, kparams = jax.random.split(root, 5)

    # two named feature streams, channel counts 4 and 12 -> input_channels=16
    features_cfg = {"eeg": {"shape": (4,)}, "accel": {"shape": (12,)}}

    # ---- small-shape check (batch=2, seq=8); Pallas path forced ------------
    x_small = {
        "eeg": jax.random.normal(kx1, (2, 8, 4), jnp.float32),
        "accel": jax.random.normal(kx2, (2, 8, 12), jnp.float32),
    }
    mod = FullyConnected(features_cfg, layers=[32, 32], dropout=0.0,
                         key=kparams, min_rows_for_pallas=0)
    out = jax.block_until_ready(mod(x_small))
    ref = reference_forward(mod, x_small)
    assert out.shape == (2, 8, 32), out.shape
    assert jnp.allclose(out, ref, atol=1e-5, rtol=1e-5), "f32 kernel mismatch"

    # ---- bf16 MXU-operand variant (v6e/v7x bandwidth lever), same params ---
    mod_bf16 = FullyConnected(features_cfg, layers=[32, 32], dropout=0.0,
                              key=kparams, min_rows_for_pallas=0,
                              mxu_dtype=jnp.bfloat16)
    out_bf16 = jax.block_until_ready(mod_bf16(x_small))
    assert jnp.allclose(out_bf16, ref, atol=6e-2, rtol=6e-2), \
        "bf16 kernel mismatch"

    # ---- larger M: >=2 grid tiles + masked remainder tile ------------------
    x_big = {
        "eeg": jax.random.normal(kx3, (2, 1450, 4), jnp.float32),
        "accel": jax.random.normal(kx4, (2, 1450, 12), jnp.float32),
    }
    out_big = jax.block_until_ready(mod(x_big))
    ref_big = reference_forward(mod, x_big)
    assert out_big.shape == (2, 1450, 32), out_big.shape
    assert jnp.allclose(out_big, ref_big, atol=1e-5, rtol=1e-5), \
        "multi-tile mismatch"

    # ---- layers=None -> identity (concatenation only) ----------------------
    mod_id = FullyConnected(features_cfg, layers=None)
    out_id = jax.block_until_ready(mod_id(x_small))
    assert jnp.allclose(
        out_id, jnp.concatenate([x_small["eeg"], x_small["accel"]], axis=-1))

    print("KERNEL_OK")
</pallas_src>

<mosaic_0001>
module attributes {stable_mosaic.version = 11 : i64} {
  func.func @_fused_mlp_kernel(%arg0: i32, %arg1: memref<16x4xf32, #tpu.memory_space<vmem>>, %arg2: memref<16x12xf32, #tpu.memory_space<vmem>>, %arg3: memref<16x128xf32, #tpu.memory_space<vmem>>, %arg4: memref<1x128xf32, #tpu.memory_space<vmem>>, %arg5: memref<128x32xf32, #tpu.memory_space<vmem>>, %arg6: memref<1x32xf32, #tpu.memory_space<vmem>>, %arg7: memref<16x32xf32, #tpu.memory_space<vmem>>) attributes {dimension_semantics = [#tpu.dimension_semantics<parallel>], iteration_bounds = array<i64: 1>, scalar_prefetch = 0 : i64, scratch_operands = 0 : i64, tpu.core_type = #tpu.core_type<tc>, window_params = [{transform_indices = @transform_0, window_bounds = array<i64: 16, 4>}, {transform_indices = @transform_1, window_bounds = array<i64: 16, 12>}, {pipeline_mode = #tpu.pipeline_mode<synchronous>, transform_indices = @transform_2, window_bounds = array<i64: 16, 128>}, {pipeline_mode = #tpu.pipeline_mode<synchronous>, transform_indices = @transform_3, window_bounds = array<i64: 1, 128>}, {pipeline_mode = #tpu.pipeline_mode<synchronous>, transform_indices = @transform_4, window_bounds = array<i64: 128, 32>}, {pipeline_mode = #tpu.pipeline_mode<synchronous>, transform_indices = @transform_5, window_bounds = array<i64: 1, 32>}, {transform_indices = @transform_6, window_bounds = array<i64: 16, 32>}]} {
    %c0 = arith.constant 0 : index
    %c0_0 = arith.constant 0 : index
    %0 = vector.load %arg1[%c0, %c0_0] : memref<16x4xf32, #tpu.memory_space<vmem>>, vector<16x4xf32>
    %c0_1 = arith.constant 0 : index
    %c0_2 = arith.constant 0 : index
    %1 = vector.load %arg2[%c0_1, %c0_2] : memref<16x12xf32, #tpu.memory_space<vmem>>, vector<16x12xf32>
    %2 = tpu.concatenate %0, %1 in 1 : vector<16x4xf32>, vector<16x12xf32> -> vector<16x16xf32>
    %c0_3 = arith.constant 0 : index
    %c0_4 = arith.constant 0 : index
    %3 = vector.load %arg3[%c0_3, %c0_4] : memref<16x128xf32, #tpu.memory_space<vmem>>, vector<16x128xf32>
    %c0_5 = arith.constant 0 : index
    %c0_6 = arith.constant 0 : index
    %4 = vector.load %arg4[%c0_5, %c0_6] : memref<1x128xf32, #tpu.memory_space<vmem>>, vector<1x128xf32>
    %cst = arith.constant dense<0.000000e+00> : vector<16x128xf32>
    %5 = tpu.matmul %2, %3, %cst {dimension_numbers = #tpu.dot_dimension_numbers<[1], [0], [0], [1], [0, 0, 1, 1], [], []>} : vector<16x16xf32>, vector<16x128xf32>, vector<16x128xf32> -> vector<16x128xf32>
    %6 = vector.broadcast %4 : vector<1x128xf32> to vector<16x128xf32>
    %7 = arith.addf %5, %6 : vector<16x128xf32>
    %cst_7 = arith.constant 0.000000e+00 : f32
    %8 = vector.broadcast %cst_7 : f32 to vector<16x128xf32>
    %9 = arith.maximumf %7, %8 : vector<16x128xf32>
    %c0_8 = arith.constant 0 : index
    %c0_9 = arith.constant 0 : index
    %10 = vector.load %arg5[%c0_8, %c0_9] : memref<128x32xf32, #tpu.memory_space<vmem>>, vector<128x32xf32>
    %c0_10 = arith.constant 0 : index
    %c0_11 = arith.constant 0 : index
    %11 = vector.load %arg6[%c0_10, %c0_11] : memref<1x32xf32, #tpu.memory_space<vmem>>, vector<1x32xf32>
    %cst_12 = arith.constant dense<0.000000e+00> : vector<16x32xf32>
    %12 = tpu.matmul %9, %10, %cst_12 {dimension_numbers = #tpu.dot_dimension_numbers<[1], [0], [0], [1], [0, 0, 1, 1], [], []>} : vector<16x128xf32>, vector<128x32xf32>, vector<16x32xf32> -> vector<16x32xf32>
    %13 = vector.broadcast %11 : vector<1x32xf32> to vector<16x32xf32>
    %14 = arith.addf %12, %13 : vector<16x32xf32>
    %cst_13 = arith.constant 0.000000e+00 : f32
    %15 = vector.broadcast %cst_13 : f32 to vector<16x32xf32>
    %16 = arith.maximumf %14, %15 : vector<16x32xf32>
    %c0_14 = arith.constant 0 : index
    %c0_15 = arith.constant 0 : index
    %17 = vector.load %arg7[%c0_14, %c0_15] : memref<16x32xf32, #tpu.memory_space<vmem>>, vector<16x32xf32>
    tpu.vector_store %arg7[%c0_14, %c0_15], %16 {strides = array<i32>} : memref<16x32xf32, #tpu.memory_space<vmem>>, vector<16x32xf32>,
    return
  }
  func.func @transform_0(%arg0: i32) -> (i32, i32) {
    %c0_i32 = arith.constant 0 : i32
    %c0_i32_0 = arith.constant 0 : i32
    return %arg0, %c0_i32 : i32, i32
  }
  func.func @transform_1(%arg0: i32) -> (i32, i32) {
    %c0_i32 = arith.constant 0 : i32
    %c0_i32_0 = arith.constant 0 : i32
    return %arg0, %c0_i32 : i32, i32
  }
  func.func @transform_2(%arg0: i32) -> (i32, i32) {
    %c0_i32 = arith.constant 0 : i32
    %c0_i32_0 = arith.constant 0 : i32
    %c0_i32_1 = arith.constant 0 : i32
    return %c0_i32, %c0_i32_0 : i32, i32
  }
  func.func @transform_3(%arg0: i32) -> (i32, i32) {
    %c0_i32 = arith.constant 0 : i32
    %c0_i32_0 = arith.constant 0 : i32
    %c0_i32_1 = arith.constant 0 : i32
    return %c0_i32, %c0_i32_0 : i32, i32
  }
  func.func @transform_4(%arg0: i32) -> (i32, i32) {
    %c0_i32 = arith.constant 0 : i32
    %c0_i32_0 = arith.constant 0 : i32
    %c0_i32_1 = arith.constant 0 : i32
    return %c0_i32, %c0_i32_0 : i32, i32
  }
  func.func @transform_5(%arg0: i32) -> (i32, i32) {
    %c0_i32 = arith.constant 0 : i32
    %c0_i32_0 = arith.constant 0 : i32
    %c0_i32_1 = arith.constant 0 : i32
    return %c0_i32, %c0_i32_0 : i32, i32
  }
  func.func @transform_6(%arg0: i32) -> (i32, i32) {
    %c0_i32 = arith.constant 0 : i32
    %c0_i32_0 = arith.constant 0 : i32
    return %arg0, %c0_i32 : i32, i32
  }
}

</mosaic_0001>

<llo_original>
// kernel: tpu_custom_call.1
$region0: #{tpu_custom_call.1}
  #allocation0 [shape = 'u32[]', space=smem, size = 0x4, offset = 0x4, fixed_abs, tag = 'smem constant byte address 0x4 - core index']
  #allocation1 [shape = 'u32[144,128]{1,0:T(1,128)}', space=vmem, size = 0x12000, scoped, tag = 'internal scratch']
  %s0 = inlined_call_operand.vmem [shape: f32[16,4], index: 0, kind: input, shape index: {}]
  %s1 = inlined_call_operand.vmem [shape: f32[16,12], index: 1, kind: input, shape index: {}]
  %s2 = inlined_call_operand.vmem [shape: f32[16,128], index: 2, kind: input, shape index: {}]
  %s3 = inlined_call_operand.vmem [shape: f32[1,128], index: 3, kind: input, shape index: {}]
  %s4 = inlined_call_operand.vmem [shape: f32[128,32], index: 4, kind: input, shape index: {}]
  %s5 = inlined_call_operand.vmem [shape: f32[1,32], index: 5, kind: input, shape index: {}]
  %s6 = inlined_call_operand.hbm [shape: f32[16,32], index: 6, kind: output, shape index: {}]
  %s7 = sld [smem:[#allocation0]]
  $region34: #{tpu_custom_call.1} parent=0
    _
  %s9 = ssub.s32 1, %s7
  %s10 = scalar_select 0, %s9, %s7
  $region1: #{tpu_custom_call.1} parent=0
    #allocation2 [shape = 'u8[8192]{0}', space=vmem, size = 0x2000, scoped, tag = 'output window, operand 0, single buffered']
    #allocation3 [shape = 's32[1]{0}', space=sflag, size = 0x4, scoped, tag = 'scoped memory for tpu_custom_call.1']
    %11 = vsyncpa [#allocation3], 0
    // Predicated region
    $region2: #{tpu_custom_call.1} parent=1 // pred_check
      _
    $region3: #{tpu_custom_call.1} parent=1 // pred_check_branch
      %13 = sbr.rel (0) target = $region5
    $region4: #{tpu_custom_call.1} parent=1 // pred_region
      _
    $region5: #{tpu_custom_call.1} parent=1 // pred_fallthru
      _
    // Predicated region
    $region6: #{tpu_custom_call.1} parent=1 // pred_check
      _
    $region7: #{tpu_custom_call.1} parent=1 // pred_check_branch
      %15 = sbr.rel (0) target = $region9
    $region8: #{tpu_custom_call.1} parent=1 // pred_region
      _
    $region9: #{tpu_custom_call.1} parent=1 // pred_fallthru
      _
    // Predicated region
    $region10: #{tpu_custom_call.1} parent=1 // pred_check
      _
    $region11: #{tpu_custom_call.1} parent=1 // pred_check_branch
      %17 = sbr.rel (0) target = $region13
    $region12: #{tpu_custom_call.1} parent=1 // pred_region
      _
    $region13: #{tpu_custom_call.1} parent=1 // pred_fallthru
      _
    // Predicated region
    $region14: #{tpu_custom_call.1} parent=1 // pred_check
      _
    $region15: #{tpu_custom_call.1} parent=1 // pred_check_branch
      %19 = sbr.rel (0) target = $region17
    $region16: #{tpu_custom_call.1} parent=1 // pred_region
      _
    $region17: #{tpu_custom_call.1} parent=1 // pred_fallthru
      _
    // Predicated region
    $region18: #{tpu_custom_call.1} parent=1 // pred_check
      _
    $region19: #{tpu_custom_call.1} parent=1 // pred_check_branch
      %21 = sbr.rel (0) target = $region21
    $region20: #{tpu_custom_call.1} parent=1 // pred_region
      _
    $region21: #{tpu_custom_call.1} parent=1 // pred_fallthru
      _
    // Predicated region
    $region22: #{tpu_custom_call.1} parent=1 // pred_check
      _
    $region23: #{tpu_custom_call.1} parent=1 // pred_check_branch
      %23 = sbr.rel (0) target = $region25
    $region24: #{tpu_custom_call.1} parent=1 // pred_region
      _
    $region25: #{tpu_custom_call.1} parent=1 // pred_fallthru
      _
    %v24 = vld [vmem:[%s0] sm:$0xff]
    %v25 = vld [vmem:[%s0 + $0x8] sm:$0xff]
    %v26 = vld [vmem:[%s1] sm:$0xff]
    %v27 = vld [vmem:[%s1 + $0x8] sm:$0xff]
    %30 = vrot.lane.b32.xlu0 %v26, 4
    %v31 = vpop.permute.xlu0 %30
    %32 = vrot.lane.b32.xlu0 %v27, 4
    %v33 = vpop.permute.xlu0 %32
    %vm36 = vcmask 31744
    %v37 = vsel %vm36, %v24, %v31
    %v38 = vsel %vm36, %v25, %v33
    %v39 = vld [vmem:[%s2] sm:$0xff]
    %v40 = vld [vmem:[%s2 + $0x8] sm:$0xff]
    %v41 = vld [vmem:[%s3] sm:$0x1]
    %v43 = vlaneseq
    %v44 = vshrl.u32 %v43, 7
    %v45 = vsub.s32 0, %v44
    %v46 = vrot.slane %v41, %v45
    %vm48 = vcmask 130048
    %v50 = vsel %vm48, %v37, 0
    %v53 = vsel %vm48, %v38, 0
    %55 = vmatprep.subr.mxu0 0.0
    %56 = vmatpush1.msra.mxu0 %v39
    %57 = vmatprep.subr.mxu0 0.0
    %58 = vmatpush1.msra.mxu0 %v40
    %59 = vmatprep.subr.mxu0 0.0
    %60 = vmatpush1.msra.mxu0 0.0
    %61 = vmatprep.subr.mxu0 0.0
    %62 = vmatpush1.msra.mxu0 0.0
    %63 = vmatprep.subr.mxu0 0.0
    %64 = vmatpush1.msra.mxu0 0.0
    %65 = vmatprep.subr.mxu0 0.0
    %66 = vmatpush1.msra.mxu0 0.0
    %67 = vmatprep.subr.mxu0 0.0
    %68 = vmatpush1.msra.mxu0 0.0
    %69 = vmatprep.subr.mxu0 0.0
    %70 = vmatpush1.msra.mxu0 0.0
    %71 = vmatprep.subr.mxu0 0.0
    %72 = vmatpush1.msra.mxu0 0.0
    %73 = vmatprep.subr.mxu0 0.0
    %74 = vmatpush1.msra.mxu0 0.0
    %75 = vmatprep.subr.mxu0 0.0
    %76 = vmatpush1.msra.mxu0 0.0
    %77 = vmatprep.subr.mxu0 0.0
    %78 = vmatpush1.msra.mxu0 0.0
    %79 = vmatprep.subr.mxu0 0.0
    %80 = vmatpush1.msra.mxu0 0.0
    %81 = vmatprep.subr.mxu0 0.0
    %82 = vmatpush1.msra.mxu0 0.0
    %83 = vmatprep.subr.mxu0 0.0
    %84 = vmatpush1.msra.mxu0 0.0
    %85 = vmatprep.subr.mxu0 0.0
    %86 = vmatpush1.msra.mxu0 0.0
    %87 = vmatprep.subr.mxu0 0.0
    %88 = vmatpush1.msra.mxu0 0.0
    %89 = vmatprep.subr.mxu0 0.0
    %90 = vmatpush1.msra.mxu0 0.0
    %91 = vmatprep.subr.mxu0 0.0
    %92 = vmatpush1.msra.mxu0 0.0
    %93 = vmatprep.subr.mxu0 0.0
    %94 = vmatpush1.msra.mxu0 0.0
    %95 = vmatprep.subr.mxu0 0.0
    %96 = vmatpush1.msra.mxu0 0.0
    %97 = vmatprep.subr.mxu0 0.0
    %98 = vmatpush1.msra.mxu0 0.0
    %99 = vmatprep.subr.mxu0 0.0
    %100 = vmatpush1.msra.mxu0 0.0
    %101 = vmatprep.subr.mxu0 0.0
    %102 = vmatpush1.msra.mxu0 0.0
    %103 = vmatprep.subr.mxu0 0.0
    %104 = vmatpush1.msra.mxu0 0.0
    %105 = vmatprep.subr.mxu0 0.0
    %106 = vmatpush1.msra.mxu0 0.0
    %107 = vmatprep.subr.mxu0 0.0
    %108 = vmatpush1.msra.mxu0 0.0
    %109 = vmatprep.subr.mxu0 0.0
    %110 = vmatpush1.msra.mxu0 0.0
    %111 = vmatprep.subr.mxu0 0.0
    %112 = vmatpush1.msra.mxu0 0.0
    %113 = vmatprep.subr.mxu0 0.0
    %114 = vmatpush1.msra.mxu0 0.0
    %115 = vmatprep.subr.mxu0 0.0
    %116 = vmatpush1.msra.mxu0 0.0
    %117 = vmatprep.subr.mxu0 0.0
    %118 = vmatpush1.msra.mxu0 0.0
    %119 = vmatprep.mubr.f32.mxu0 0.0
    %120 = vmatmul.mubr.f32.gmra.mrb[0].mxu0 %v50
    %v121 = vpop.f32.mrb[0].mxu0
    %v122 = vadd.f32 %v46, %v121
    %v123 = vpop.f32.mrb[0].mxu0
    %124 = vmatprep.mubr.f32.mxu0 0.0
    %125 = vmatmul.mubr.f32.gmra.mrb[0].mxu0 %v53
    %v126 = vpop.f32.mrb[0].mxu0
    %v127 = vadd.f32 %v46, %v126
    %v128 = vpop.f32.mrb[0].mxu0
    %129 = vdwg.mxu0
    %v130 = vmax.f32 %v122, 0.0
    %v131 = vmax.f32 %v127, 0.0
    %v132 = vld [vmem:[%s4] sm:$0xff]
    %v133 = vld [vmem:[%s4 + $0x8] sm:$0xff]
    %v134 = vld [vmem:[%s4 + $0x10] sm:$0xff]
    %v135 = vld [vmem:[%s4 + $0x18] sm:$0xff]
    %v136 = vld [vmem:[%s4 + $0x20] sm:$0xff]
    %v137 = vld [vmem:[%s4 + $0x28] sm:$0xff]
    %v138 = vld [vmem:[%s4 + $0x30] sm:$0xff]
    %v139 = vld [vmem:[%s4 + $0x38] sm:$0xff]
    %v140 = vld [vmem:[%s4 + $0x40] sm:$0xff]
    %v141 = vld [vmem:[%s4 + $0x48] sm:$0xff]
    %v142 = vld [vmem:[%s4 + $0x50] sm:$0xff]
    %v143 = vld [vmem:[%s4 + $0x58] sm:$0xff]
    %v144 = vld [vmem:[%s4 + $0x60] sm:$0xff]
    %v145 = vld [vmem:[%s4 + $0x68] sm:$0xff]
    %v146 = vld [vmem:[%s4 + $0x70] sm:$0xff]
    %v147 = vld [vmem:[%s4 + $0x78] sm:$0xff]
    %v148 = vld [vmem:[%s5] sm:$0x1]
    %v150 = vlaneseq
    %v151 = vshrl.u32 %v150, 7
    %v152 = vsub.s32 0, %v151
    %v153 = vrot.slane %v148, %v152
    %155 = vmatprep.subr.mxu0 0.0
    %156 = vmatpush1.msra.mxu0 %v132
    %157 = vmatprep.subr.mxu0 0.0
    %158 = vmatpush1.msra.mxu0 %v133
    %159 = vmatprep.subr.mxu0 0.0
    %160 = vmatpush1.msra.mxu0 %v134
    %161 = vmatprep.subr.mxu0 0.0
    %162 = vmatpush1.msra.mxu0 %v135
    %163 = vmatprep.subr.mxu0 0.0
    %164 = vmatpush1.msra.mxu0 %v136
    %165 = vmatprep.subr.mxu0 0.0
    %166 = vmatpush1.msra.mxu0 %v137
    %167 = vmatprep.subr.mxu0 0.0
    %168 = vmatpush1.msra.mxu0 %v138
    %169 = vmatprep.subr.mxu0 0.0
    %170 = vmatpush1.msra.mxu0 %v139
    %171 = vmatprep.subr.mxu0 0.0
    %172 = vmatpush1.msra.mxu0 %v140
    %173 = vmatprep.subr.mxu0 0.0
    %174 = vmatpush1.msra.mxu0 %v141
    %175 = vmatprep.subr.mxu0 0.0
    %176 = vmatpush1.msra.mxu0 %v142
    %177 = vmatprep.subr.mxu0 0.0
    %178 = vmatpush1.msra.mxu0 %v143
    %179 = vmatprep.subr.mxu0 0.0
    %180 = vmatpush1.msra.mxu0 %v144
    %181 = vmatprep.subr.mxu0 0.0
    %182 = vmatpush1.msra.mxu0 %v145
    %183 = vmatprep.subr.mxu0 0.0
    %184 = vmatpush1.msra.mxu0 %v146
    %185 = vmatprep.subr.mxu0 0.0
    %186 = vmatpush1.msra.mxu0 %v147
    %187 = vmatprep.subr.mxu0 0.0
    %188 = vmatpush1.msra.mxu0 0.0
    %189 = vmatprep.subr.mxu0 0.0
    %190 = vmatpush1.msra.mxu0 0.0
    %191 = vmatprep.subr.mxu0 0.0
    %192 = vmatpush1.msra.mxu0 0.0
    %193 = vmatprep.subr.mxu0 0.0
    %194 = vmatpush1.msra.mxu0 0.0
    %195 = vmatprep.subr.mxu0 0.0
    %196 = vmatpush1.msra.mxu0 0.0
    %197 = vmatprep.subr.mxu0 0.0
    %198 = vmatpush1.msra.mxu0 0.0
    %199 = vmatprep.subr.mxu0 0.0
    %200 = vmatpush1.msra.mxu0 0.0
    %201 = vmatprep.subr.mxu0 0.0
    %202 = vmatpush1.msra.mxu0 0.0
    %203 = vmatprep.subr.mxu0 0.0
    %204 = vmatpush1.msra.mxu0 0.0
    %205 = vmatprep.subr.mxu0 0.0
    %206 = vmatpush1.msra.mxu0 0.0
    %207 = vmatprep.subr.mxu0 0.0
    %208 = vmatpush1.msra.mxu0 0.0
    %209 = vmatprep.subr.mxu0 0.0
    %210 = vmatpush1.msra.mxu0 0.0
    %211 = vmatprep.subr.mxu0 0.0
    %212 = vmatpush1.msra.mxu0 0.0
    %213 = vmatprep.subr.mxu0 0.0
    %214 = vmatpush1.msra.mxu0 0.0
    %215 = vmatprep.subr.mxu0 0.0
    %216 = vmatpush1.msra.mxu0 0.0
    %217 = vmatprep.subr.mxu0 0.0
    %218 = vmatpush1.msra.mxu0 0.0
    %219 = vmatprep.mubr.f32.mxu0 0.0
    %220 = vmatmul.mubr.f32.gmra.mrb[0].mxu0 %v130
    %v221 = vpop.f32.mrb[0].mxu0
    %v222 = vadd.f32 %v153, %v221
    %v223 = vpop.f32.mrb[0].mxu0
    %224 = vmatprep.mubr.f32.mxu0 0.0
    %225 = vmatmul.mubr.f32.gmra.mrb[0].mxu0 %v131
    %v226 = vpop.f32.mrb[0].mxu0
    %v227 = vadd.f32 %v153, %v226
    %v228 = vpop.f32.mrb[0].mxu0
    %229 = vdwg.mxu0
    %v230 = vmax.f32 %v222, 0.0
    %v231 = vmax.f32 %v227, 0.0
    %vm232 = vcmask 261120
    %233 = vst.msk [vmem:[#allocation2] sm:$0xff] %vm232, %v230
    %234 = vst.msk [vmem:[#allocation2 + $0x8] sm:$0xff] %vm232, %v231
    // Predicated region
    $region26: #{tpu_custom_call.1} parent=1 // pred_check
      _
    $region27: #{tpu_custom_call.1} parent=1 // pred_check_branch
      %236 = sbr.rel (0) target = $region29
    $region28: #{tpu_custom_call.1} parent=1 // pred_region
      %s238 = ssub.s32 256, 256
      %239 = vsyncadd [#allocation3], %s238
      %s240 = sshll.u32 [#allocation2], 4
      %s241 = int_to_ptr.vmem [resolvable:$true] %s240
      %246 = dma.vmem_to_hbm [thread:$0]  %s241, 256, %s6, [#allocation3], 128, 128, 8
    $region29: #{tpu_custom_call.1} parent=1 // pred_fallthru
      _
    // Predicated region
    $region30: #{tpu_custom_call.1} parent=1 // pred_check
      _
    $region31: #{tpu_custom_call.1} parent=1 // pred_check_branch
      %248 = sbr.rel (0) target = $region33
    $region32: #{tpu_custom_call.1} parent=1 // pred_region
      %249 = dma.done [#allocation3], 256
    $region33: #{tpu_custom_call.1} parent=1 // pred_fallthru
      _
    %250 = vsyncpa [#allocation3], 1

</llo_original>
